<compile_context>
chip_gen: v7x
topology: tpu7x:2x2x1
jax: 0.10.0
libtpu: 0.0.40
codegen_flags: <defaults>
</compile_context>

<pallas_src>
import math

import jax
import jax.numpy as jnp
from jax.experimental import pallas as pl
from jax.experimental.pallas import tpu as pltpu

D = 32                      # head_dim / feature width
N_Q = 8                     # n_queries (== n_keys so the first bmm is valid)
N_K = 8
N_V = 32                    # must equal D for the second bmm to be valid
LANE = 128                  # TPU lane width
LANE_REP = LANE // D        # 4 copies of the 32-wide row per 128-lane row
SUB_REP = D // LANE_REP     # 8 lane-dense rows per batch (32 rows / 4 per row)
INV_SCALE = 1.0 / math.sqrt(D)


def _fused_attn_mlp_kernel(x_ref, wf_ref, bf_ref, o_ref):
    """Single fused MXU pass + lane-dense broadcast store. No grid."""
    B = x_ref.shape[0]

    # Fused Linear:  rows = x @ (Wv^T Wout^T) + (bv Wout^T + bout)   (B, 32)
    rows = jnp.dot(x_ref[...], wf_ref[...],
                   preferred_element_type=jnp.float32) + bf_ref[...]

    # Lane-dense slab: 4 lane copies, 8 sublane copies per batch -> (B*8, 128)
    tiled = jnp.concatenate([rows] * LANE_REP, axis=-1)          # (B, 128)
    res = jnp.broadcast_to(tiled[:, None, :], (B, SUB_REP, LANE))
    o_ref[...] = res.reshape(B * SUB_REP, LANE).astype(o_ref.dtype)


def fuse_params(params):
    """One-time preprocessing: fold the two Linears into one weight/bias."""
    wqkv, bqkv, wout, bout = params
    wv = wqkv[2 * D:3 * D, :]                 # (32, 32) live v-slice of qkv
    bv = bqkv[2 * D:3 * D]                    # (32,)
    w_fused = wv.T @ wout.T                   # (32, 32)
    b_fused = (bv @ wout.T + bout).reshape(1, D)
    return w_fused, b_fused


def model_forward(x1, x2, fused_params):
    """Pallas-backed equivalent of Model.forward(x1, x2)."""
    del x2  # x2 is unused by the PyTorch forward as well
    B = x1.shape[0]
    w_fused, b_fused = fused_params

    vmem = pl.BlockSpec(memory_space=pltpu.MemorySpace.VMEM)
    out_dense = pl.pallas_call(
        _fused_attn_mlp_kernel,
        out_shape=jax.ShapeDtypeStruct((B * SUB_REP, LANE), jnp.float32),
        in_specs=[vmem, vmem, vmem],
        out_specs=vmem,
        cost_estimate=pl.CostEstimate(
            flops=2 * B * D * D,
            transcendentals=0,
            bytes_accessed=4 * (B * D + D * D + D + B * D * D)),
    )(x1, w_fused, b_fused)

    # Free row-major metadata reshape back to the module's output shape.
    return out_dense.reshape(B * D, D)


def model_forward_ref(x1, x2, params):
    """Pure-JAX reference mirroring the (shape-corrected) torch dataflow."""
    del x2
    wqkv, bqkv, wout, bout = params
    qkv = x1 @ wqkv.T + bqkv
    q, k, v = jnp.split(qkv, 3, axis=-1)
    q_rep = jnp.repeat(q[:, None, :], N_Q, axis=1)          # (B, 8, 32)
    k_rep = jnp.repeat(k[:, None, :], N_K, axis=1)          # (B, 8, 32)
    v_rep = jnp.repeat(v[:, None, :], N_V, axis=1)          # (B, 32, 32)
    att = jnp.einsum('bqd,bqe->bde', q_rep, k_rep)          # q^T @ k
    weights = jax.nn.softmax(att * INV_SCALE, axis=-1)
    o = jnp.einsum('bde,bef->bdf', weights, v_rep)
    o = o.reshape(-1, D)
    return o @ wout.T + bout


def init_params(key):
    """Deterministic torch.nn.Linear-style init (uniform +-1/sqrt(fan_in))."""
    k1, k2, k3, k4 = jax.random.split(key, 4)
    bound = 1.0 / math.sqrt(D)
    wqkv = jax.random.uniform(k1, (3 * D, D), jnp.float32, -bound, bound)
    bqkv = jax.random.uniform(k2, (3 * D,), jnp.float32, -bound, bound)
    wout = jax.random.uniform(k3, (D, D), jnp.float32, -bound, bound)
    bout = jax.random.uniform(k4, (D,), jnp.float32, -bound, bound)
    return wqkv, bqkv, wout, bout


if __name__ == "__main__":
    key = jax.random.PRNGKey(0)
    kx1, kx2, kp = jax.random.split(key, 3)
    x1 = jax.random.normal(kx1, (2, D), jnp.float32)
    x2 = jax.random.normal(kx2, (2, D), jnp.float32)  # unused by forward
    params = init_params(kp)

    # One-time preprocessing (outside the per-call dispatch path).
    fused_params = jax.tree_util.tree_map(jax.block_until_ready,
                                          fuse_params(params))

    out = model_forward(x1, x2, fused_params)
    out = jax.block_until_ready(out)

    ref = model_forward_ref(x1, x2, params)
    assert out.shape == (2 * D, D), out.shape
    max_err = float(jnp.max(jnp.abs(out - ref)))
    assert jnp.allclose(out, ref, atol=1e-4, rtol=1e-4), max_err
    print("KERNEL_OK")
</pallas_src>

<mosaic_0001>
module attributes {stable_mosaic.version = 11 : i64} {
  func.func @_fused_attn_mlp_kernel(%arg0: memref<2x32xf32, #tpu.memory_space<vmem>>, %arg1: memref<32x32xf32, #tpu.memory_space<vmem>>, %arg2: memref<1x32xf32, #tpu.memory_space<vmem>>, %arg3: memref<16x128xf32, #tpu.memory_space<vmem>>) attributes {dimension_semantics = [], scalar_prefetch = 0 : i64, scratch_operands = 0 : i64, tpu.core_type = #tpu.core_type<tc>} {
    %c0 = arith.constant 0 : index
    %c0_0 = arith.constant 0 : index
    %0 = vector.load %arg0[%c0, %c0_0] : memref<2x32xf32, #tpu.memory_space<vmem>>, vector<2x32xf32>
    %c0_1 = arith.constant 0 : index
    %c0_2 = arith.constant 0 : index
    %1 = vector.load %arg1[%c0_1, %c0_2] : memref<32x32xf32, #tpu.memory_space<vmem>>, vector<32x32xf32>
    %cst = arith.constant dense<0.000000e+00> : vector<2x32xf32>
    %2 = tpu.matmul %0, %1, %cst {dimension_numbers = #tpu.dot_dimension_numbers<[1], [0], [0], [1], [0, 0, 1, 1], [], []>} : vector<2x32xf32>, vector<32x32xf32>, vector<2x32xf32> -> vector<2x32xf32>
    %c0_3 = arith.constant 0 : index
    %c0_4 = arith.constant 0 : index
    %3 = vector.load %arg2[%c0_3, %c0_4] : memref<1x32xf32, #tpu.memory_space<vmem>>, vector<1x32xf32>
    %4 = vector.broadcast %3 : vector<1x32xf32> to vector<2x32xf32>
    %5 = arith.addf %2, %4 : vector<2x32xf32>
    %6 = tpu.concatenate %5, %5, %5, %5 in 1 : vector<2x32xf32>, vector<2x32xf32>, vector<2x32xf32>, vector<2x32xf32> -> vector<2x128xf32>
    %7 = vector.shape_cast %6 : vector<2x128xf32> to vector<2x1x128xf32>
    %8 = vector.shape_cast %7 : vector<2x1x128xf32> to vector<2x1x128xf32>
    %9 = vector.broadcast %8 : vector<2x1x128xf32> to vector<2x8x128xf32>
    %10 = vector.shape_cast %9 : vector<2x8x128xf32> to vector<16x128xf32>
    %c0_5 = arith.constant 0 : index
    %c0_6 = arith.constant 0 : index
    %11 = vector.load %arg3[%c0_5, %c0_6] : memref<16x128xf32, #tpu.memory_space<vmem>>, vector<16x128xf32>
    tpu.vector_store %arg3[%c0_5, %c0_6], %10 {strides = array<i32>} : memref<16x128xf32, #tpu.memory_space<vmem>>, vector<16x128xf32>,
    return
  }
}

</mosaic_0001>

<llo_original>
// kernel: tpu_custom_call.1
$region0: #{tpu_custom_call.1}
  #allocation0 [shape = 'u32[]', space=smem, size = 0x4, offset = 0x4, fixed_abs, tag = 'smem constant byte address 0x4 - core index']
  #allocation1 [shape = 'u32[144,128]{1,0:T(1,128)}', space=vmem, size = 0x12000, scoped, tag = 'internal scratch']
  %s0 = inlined_call_operand.hbm [shape: f32[2,32], index: 0, kind: input, shape index: {}]
  %s1 = inlined_call_operand.hbm [shape: f32[32,32], index: 1, kind: input, shape index: {}]
  %s2 = inlined_call_operand.vmem [shape: f32[1,32], index: 2, kind: input, shape index: {}]
  %s3 = inlined_call_operand.hbm [shape: f32[16,128], index: 3, kind: output, shape index: {}]
  %s4 = sld [smem:[#allocation0]]
  $region30: #{tpu_custom_call.1} parent=0
    _
  %s6 = ssub.s32 1, %s4
  %s7 = scalar_select 0, %s6, %s4
  $region1: #{tpu_custom_call.1} parent=0
    #allocation2 [shape = 'u8[1024]{0}', space=vmem, size = 0x400, scoped, tag = 'input window, operand 0, single buffered']
    #allocation3 [shape = 's32[1]{0}', space=sflag, size = 0x4, scoped, tag = 'scoped memory for tpu_custom_call.1']
    #allocation4 [shape = 's32[1]{0}', space=sflag, size = 0x4, scoped, tag = 'scoped memory for tpu_custom_call.1']
    #allocation5 [shape = 'u8[16384]{0}', space=vmem, size = 0x4000, scoped, tag = 'input window, operand 1, single buffered']
    #allocation6 [shape = 's32[1]{0}', space=sflag, size = 0x4, scoped, tag = 'scoped memory for tpu_custom_call.1']
    #allocation7 [shape = 'u8[8192]{0}', space=vmem, size = 0x2000, scoped, tag = 'output window, operand 0, single buffered']
    %8 = vsyncpa [#allocation3], 0
    %9 = vsyncpa [#allocation6], 0
    %10 = vsyncpa [#allocation4], 0
    // Predicated region
    $region2: #{tpu_custom_call.1} parent=1 // pred_check
      _
    $region3: #{tpu_custom_call.1} parent=1 // pred_check_branch
      %12 = sbr.rel (0) target = $region5
    $region4: #{tpu_custom_call.1} parent=1 // pred_region
      %s14 = ssub.s32 32, 32
      %15 = vsyncadd [#allocation3], %s14
      %s17 = sshll.u32 [#allocation2], 4
      %s18 = int_to_ptr.vmem [resolvable:$true] %s17
      %20 = dma.hbm_to_vmem [thread:$0]  %s0, 32, %s18, [#allocation3]
    $region5: #{tpu_custom_call.1} parent=1 // pred_fallthru
      _
    // Predicated region
    $region6: #{tpu_custom_call.1} parent=1 // pred_check
      _
    $region7: #{tpu_custom_call.1} parent=1 // pred_check_branch
      %22 = sbr.rel (0) target = $region9
    $region8: #{tpu_custom_call.1} parent=1 // pred_region
      %s24 = ssub.s32 512, 512
      %25 = vsyncadd [#allocation6], %s24
      %s26 = sshll.u32 [#allocation5], 4
      %s27 = int_to_ptr.vmem [resolvable:$true] %s26
      %32 = dma.hbm_to_vmem [thread:$0]  %s1, 512, %s27, [#allocation6], 128, 128, 8
    $region9: #{tpu_custom_call.1} parent=1 // pred_fallthru
      _
    // Predicated region
    $region10: #{tpu_custom_call.1} parent=1 // pred_check
      _
    $region11: #{tpu_custom_call.1} parent=1 // pred_check_branch
      %34 = sbr.rel (0) target = $region13
    $region12: #{tpu_custom_call.1} parent=1 // pred_region
      _
    $region13: #{tpu_custom_call.1} parent=1 // pred_fallthru
      _
    // Predicated region
    $region14: #{tpu_custom_call.1} parent=1 // pred_check
      _
    $region15: #{tpu_custom_call.1} parent=1 // pred_check_branch
      %36 = sbr.rel (0) target = $region17
    $region16: #{tpu_custom_call.1} parent=1 // pred_region
      %37 = dma.done [#allocation3], 32
    $region17: #{tpu_custom_call.1} parent=1 // pred_fallthru
      _
    // Predicated region
    $region18: #{tpu_custom_call.1} parent=1 // pred_check
      _
    $region19: #{tpu_custom_call.1} parent=1 // pred_check_branch
      %39 = sbr.rel (0) target = $region21
    $region20: #{tpu_custom_call.1} parent=1 // pred_region
      %40 = dma.done [#allocation6], 512
    $region21: #{tpu_custom_call.1} parent=1 // pred_fallthru
      _
    %v41 = vld [vmem:[#allocation2] sm:$0x3]
    %v42 = vld [vmem:[#allocation5] sm:$0xff]
    %v43 = vld [vmem:[#allocation5 + $0x8] sm:$0xff]
    %v44 = vld [vmem:[#allocation5 + $0x10] sm:$0xff]
    %v45 = vld [vmem:[#allocation5 + $0x18] sm:$0xff]
    %v46 = vld [vmem:[%s2] sm:$0x1]
    %v48 = vlaneseq
    %v49 = vshrl.u32 %v48, 7
    %v50 = vsub.s32 0, %v49
    %v51 = vrot.slane %v46, %v50
    %vm53 = vcmask 261120
    %v55 = vsel %vm53, %v41, 0
    %57 = vmatprep.subr.mxu0 0.0
    %58 = vmatpush1.msra.mxu0 %v42
    %59 = vmatprep.subr.mxu0 0.0
    %60 = vmatpush1.msra.mxu0 %v43
    %61 = vmatprep.subr.mxu0 0.0
    %62 = vmatpush1.msra.mxu0 %v44
    %63 = vmatprep.subr.mxu0 0.0
    %64 = vmatpush1.msra.mxu0 %v45
    %65 = vmatprep.subr.mxu0 0.0
    %66 = vmatpush1.msra.mxu0 0.0
    %67 = vmatprep.subr.mxu0 0.0
    %68 = vmatpush1.msra.mxu0 0.0
    %69 = vmatprep.subr.mxu0 0.0
    %70 = vmatpush1.msra.mxu0 0.0
    %71 = vmatprep.subr.mxu0 0.0
    %72 = vmatpush1.msra.mxu0 0.0
    %73 = vmatprep.subr.mxu0 0.0
    %74 = vmatpush1.msra.mxu0 0.0
    %75 = vmatprep.subr.mxu0 0.0
    %76 = vmatpush1.msra.mxu0 0.0
    %77 = vmatprep.subr.mxu0 0.0
    %78 = vmatpush1.msra.mxu0 0.0
    %79 = vmatprep.subr.mxu0 0.0
    %80 = vmatpush1.msra.mxu0 0.0
    %81 = vmatprep.subr.mxu0 0.0
    %82 = vmatpush1.msra.mxu0 0.0
    %83 = vmatprep.subr.mxu0 0.0
    %84 = vmatpush1.msra.mxu0 0.0
    %85 = vmatprep.subr.mxu0 0.0
    %86 = vmatpush1.msra.mxu0 0.0
    %87 = vmatprep.subr.mxu0 0.0
    %88 = vmatpush1.msra.mxu0 0.0
    %89 = vmatprep.subr.mxu0 0.0
    %90 = vmatpush1.msra.mxu0 0.0
    %91 = vmatprep.subr.mxu0 0.0
    %92 = vmatpush1.msra.mxu0 0.0
    %93 = vmatprep.subr.mxu0 0.0
    %94 = vmatpush1.msra.mxu0 0.0
    %95 = vmatprep.subr.mxu0 0.0
    %96 = vmatpush1.msra.mxu0 0.0
    %97 = vmatprep.subr.mxu0 0.0
    %98 = vmatpush1.msra.mxu0 0.0
    %99 = vmatprep.subr.mxu0 0.0
    %100 = vmatpush1.msra.mxu0 0.0
    %101 = vmatprep.subr.mxu0 0.0
    %102 = vmatpush1.msra.mxu0 0.0
    %103 = vmatprep.subr.mxu0 0.0
    %104 = vmatpush1.msra.mxu0 0.0
    %105 = vmatprep.subr.mxu0 0.0
    %106 = vmatpush1.msra.mxu0 0.0
    %107 = vmatprep.subr.mxu0 0.0
    %108 = vmatpush1.msra.mxu0 0.0
    %109 = vmatprep.subr.mxu0 0.0
    %110 = vmatpush1.msra.mxu0 0.0
    %111 = vmatprep.subr.mxu0 0.0
    %112 = vmatpush1.msra.mxu0 0.0
    %113 = vmatprep.subr.mxu0 0.0
    %114 = vmatpush1.msra.mxu0 0.0
    %115 = vmatprep.subr.mxu0 0.0
    %116 = vmatpush1.msra.mxu0 0.0
    %117 = vmatprep.subr.mxu0 0.0
    %118 = vmatpush1.msra.mxu0 0.0
    %119 = vmatprep.subr.mxu0 0.0
    %120 = vmatpush1.msra.mxu0 0.0
    %121 = vmatprep.mubr.f32.mxu0 0.0
    %122 = vmatmul.mubr.f32.gmra.mrb[0].mxu0 %v55
    %v123 = vpop.f32.mrb[0].mxu0
    %v124 = vadd.f32 %v51, %v123
    %v125 = vpop.f32.mrb[0].mxu0
    %126 = vdwg.mxu0
    %128 = vrot.lane.b32.xlu0 %v124, 32
    %v129 = vpop.permute.xlu0 %128
    %131 = vrot.lane.b32.xlu0 %v124, 64
    %v132 = vpop.permute.xlu0 %131
    %134 = vrot.lane.b32.xlu0 %v124, 96
    %v135 = vpop.permute.xlu0 %134
    %v137 = vsel %vm53, %v124, %v129
    %vm138 = vcmask 523264
    %v139 = vsel %vm138, %v137, %v132
    %vm140 = vcmask 785408
    %v141 = vsel %vm140, %v139, %v135
    %v144 = vunpack.c.l.s4 1966171168
    %v145 = vunpack.c.0.s8 %v144
    %v146 = vlaneseq
    %v147 = vshrl.u32 %v146, 7
    %v148 = vsub.s32 %v145, %v147
    %v149 = vrot.slane %v141, %v148
    %v150 = vcombine.high %v149, %v149
    %v152 = vunpack.c.l.s4 1966171168
    %v153 = vunpack.c.0.s8 %v152
    %v154 = vlaneseq
    %v155 = vshrl.u32 %v154, 7
    %v156 = vsub.s32 %v153, %v155
    %v157 = vrot.slane %v149, %v156
    %v159 = vunpack.c.l.s4 1966171168
    %v160 = vunpack.c.0.s8 %v159
    %v161 = vlaneseq
    %v162 = vshrl.u32 %v161, 7
    %v163 = vsub.s32 %v160, %v162
    %v164 = vrot.slane %v150, %v163
    %v165 = vlaneseq
    %v166 = vshrl.u32 %v165, 7
    %v167 = vsub.s32 0, %v166
    %v168 = vrot.slane %v157, %v167
    %v169 = vlaneseq
    %v170 = vshrl.u32 %v169, 7
    %v171 = vsub.s32 0, %v170
    %v172 = vrot.slane %v164, %v171
    %175 = vst [vmem:[#allocation7] sm:$0xff] %v168
    %176 = vst [vmem:[#allocation7 + $0x8] sm:$0xff] %v172
    // Predicated region
    $region22: #{tpu_custom_call.1} parent=1 // pred_check
      _
    $region23: #{tpu_custom_call.1} parent=1 // pred_check_branch
      %178 = sbr.rel (0) target = $region25
    $region24: #{tpu_custom_call.1} parent=1 // pred_region
      %s180 = ssub.s32 256, 256
      %181 = vsyncadd [#allocation4], %s180
      %s182 = sshll.u32 [#allocation7], 4
      %s183 = int_to_ptr.vmem [resolvable:$true] %s182
      %188 = dma.vmem_to_hbm [thread:$0]  %s183, 256, %s3, [#allocation4], 128, 128, 8
    $region25: #{tpu_custom_call.1} parent=1 // pred_fallthru
      _
    // Predicated region
    $region26: #{tpu_custom_call.1} parent=1 // pred_check
      _
    $region27: #{tpu_custom_call.1} parent=1 // pred_check_branch
      %190 = sbr.rel (0) target = $region29
    $region28: #{tpu_custom_call.1} parent=1 // pred_region
      %191 = dma.done [#allocation4], 256
    $region29: #{tpu_custom_call.1} parent=1 // pred_fallthru
      _
    %192 = vsyncpa [#allocation3], 1
    %193 = vsyncpa [#allocation6], 1
    %194 = vsyncpa [#allocation4], 1

</llo_original>
